<compile_context>
chip_gen: v6e
topology: v6e:2x2x1
jax: 0.10.0
libtpu: 0.0.40
codegen_flags: <defaults>
</compile_context>

<pallas_src>
from functools import partial

import jax
import jax.numpy as jnp
import numpy as np
from jax.experimental import pallas as pl
from jax.experimental.pallas import tpu as pltpu


# --------------------------- per-generation config -------------------------- #

def _hw_config():
    """(vmem_limit_bytes, tm_cap, tn_cap, tk_cap) tuned per TPU generation."""
    try:
        phys = int(pltpu.get_tpu_info().vmem_capacity_bytes)
    except Exception:
        phys = 64 * 1024 * 1024
    if phys >= 128 * 1024 * 1024:                 # v5e / v6e: HBM-bound linears -> big tiles
        return 100 * 1024 * 1024, 512, 1024, 1024
    return 48 * 1024 * 1024, 256, 512, 512        # v7x (64 MiB physical) / unknown


def _round_up(x, m):
    return ((x + m - 1) // m) * m


def _pick_tile(dim, cap):
    """Largest 256- (then 128-) aligned tile <= cap that divides dim, else full dim."""
    if dim <= cap:
        return dim
    for align in (256, 128):
        t = (cap // align) * align
        while t >= align:
            if dim % t == 0:
                return t
            t -= align
    return dim


def _head_group_size(num_heads, head_dim):
    """Smallest #heads per group whose combined width is 128-lane aligned, else all."""
    for g in range(1, num_heads + 1):
        if num_heads % g == 0 and (g * head_dim) % 128 == 0:
            return g
    return num_heads


def _mxu_dtype(dtype):
    # bf16 MXU operands (f32 accumulation) for f32/bf16 models: v6e/v7x MXUs are
    # bf16-native; softmax and accumulators stay in f32.
    if dtype == jnp.float32 or dtype == jnp.bfloat16:
        return jnp.bfloat16
    return dtype


# ----------------------------- Pallas kernels ------------------------------ #

def _linear_kernel(x_ref, w_ref, b_ref, o_ref, acc_ref, *, mxu_dtype):
    """(tm, tn) tile of  o = x @ w.T + b  with a K reduction over grid axis 2."""
    @pl.when(pl.program_id(2) == 0)
    def _init():
        acc_ref[...] = jnp.zeros_like(acc_ref)

    # torch (out, in) weight layout -> transposed-RHS matmul (contract K on both).
    # TODO(synk): verify with pl.lower_as_mlir that this lowers without a per-step
    # vxpose; if it does, pre-transpose the weight once in the wrapper instead.
    acc_ref[...] += jax.lax.dot_general(
        x_ref[...].astype(mxu_dtype), w_ref[...].astype(mxu_dtype),
        dimension_numbers=(((1,), (1,)), ((), ())),
        preferred_element_type=jnp.float32)

    @pl.when(pl.program_id(2) == pl.num_programs(2) - 1)
    def _finalize():
        o_ref[...] = (acc_ref[...] + b_ref[...].astype(jnp.float32)).astype(o_ref.dtype)


def _attn_proj_kernel(*refs, scale, heads_per_group, head_dim, num_groups,
                      mxu_dtype, has_bias):
    """One (batch, head-group) step: scores + softmax + PV for the group's heads,
    then the group's partial contribution to the output projection (f32 accumulated).

    refs (in order): qkv (N, 3C), mask (1, N), [bias (Gh, N, N)],
                     proj_w (C, Gh*D), proj_b (1, C), out (N, C), acc (N, C) f32
    """
    if has_bias:
        qkv_ref, mask_ref, bias_ref, wp_ref, bp_ref, o_ref, acc_ref = refs
    else:
        qkv_ref, mask_ref, wp_ref, bp_ref, o_ref, acc_ref = refs
        bias_ref = None

    g = pl.program_id(1)
    N, three_c = qkv_ref.shape
    C = three_c // 3
    Gh, D = heads_per_group, head_dim
    GW = Gh * D

    @pl.when(g == 0)
    def _init():
        acc_ref[...] = jnp.zeros_like(acc_ref)

    # Lane-aligned group column slices of the packed q|k|v slab.
    if num_groups == 1:
        q_off, k_off, v_off = 0, C, 2 * C
    else:  # GW (and therefore C) is a multiple of 128 lanes by construction
        col = pl.multiple_of(g * GW, 128)
        q_off, k_off, v_off = col, C + col, 2 * C + col
    q_grp = qkv_ref[:, pl.ds(q_off, GW)]
    k_grp = qkv_ref[:, pl.ds(k_off, GW)]
    v_grp = qkv_ref[:, pl.ds(v_off, GW)]

    # Additive key mask (0 keep / -1e30 drop).  The finite sentinel keeps fully
    # masked rows NaN-free (uniform softmax) instead of the reference's NaN row;
    # partially masked rows underflow to exact 0, matching masked_fill(-inf).
    mask_add = (mask_ref[...].astype(jnp.float32) - 1.0) * 1e30            # (1, N)

    ctx_cols = []
    for hh in range(Gh):                     # in-register sub-slices of the group
        lo, hi = hh * D, (hh + 1) * D
        q_h = (q_grp[:, lo:hi] * jnp.asarray(scale, q_grp.dtype)).astype(mxu_dtype)
        k_h = k_grp[:, lo:hi].astype(mxu_dtype)
        v_h = v_grp[:, lo:hi].astype(mxu_dtype)

        s = jax.lax.dot_general(                               # (N, N) f32 scores
            q_h, k_h, dimension_numbers=(((1,), (1,)), ((), ())),
            preferred_element_type=jnp.float32)
        if has_bias:
            s = s + bias_ref[hh].astype(jnp.float32)
        s = s + mask_add

        s = s - jnp.max(s, axis=-1, keepdims=True)
        p = jnp.exp(s)
        p = p * pl.reciprocal(jnp.sum(p, axis=-1, keepdims=True), approx=True)

        ctx_cols.append(jnp.dot(p.astype(mxu_dtype), v_h,
                                preferred_element_type=jnp.float32))       # (N, D)

    ctx = ctx_cols[0] if Gh == 1 else jnp.concatenate(ctx_cols, axis=-1)   # (N, GW)

    # Partial output projection: y += ctx_g @ proj_w[:, g-cols].T (torch layout).
    acc_ref[...] += jax.lax.dot_general(
        ctx.astype(mxu_dtype), wp_ref[...].astype(mxu_dtype),
        dimension_numbers=(((1,), (1,)), ((), ())),
        preferred_element_type=jnp.float32)

    @pl.when(g == num_groups - 1)
    def _finalize():
        o_ref[...] = (acc_ref[...] + bp_ref[...].astype(jnp.float32)).astype(o_ref.dtype)


# ------------------------------- wrappers ---------------------------------- #

def _pallas_linear(x2d, w, b):
    """x2d:(M,K) @ w:(O,K).T + b:(O,) via a tiled, K-accumulating Pallas matmul."""
    vmem_limit, tm_cap, tn_cap, tk_cap = _hw_config()
    M0, K = x2d.shape
    O = w.shape[0]

    if M0 > tm_cap:
        tm = tm_cap                              # multiple of 256 by construction
        Mp = _round_up(M0, tm)
        if Mp != M0:                             # pad rows; no unbounded full-dim tile
            x2d = jnp.pad(x2d, ((0, Mp - M0), (0, 0)))
    else:
        tm, Mp = M0, M0                          # full-dim block is always legal
    tn = _pick_tile(O, tn_cap)
    tk = _pick_tile(K, tk_cap)
    grid = (Mp // tm, O // tn, K // tk)

    itemsize = x2d.dtype.itemsize
    cost = pl.CostEstimate(
        flops=2 * Mp * K * O, transcendentals=0,
        bytes_accessed=itemsize * (Mp * K + K * O + Mp * O + O))

    out = pl.pallas_call(
        partial(_linear_kernel, mxu_dtype=_mxu_dtype(x2d.dtype)),
        out_shape=jax.ShapeDtypeStruct((Mp, O), x2d.dtype),
        grid_spec=pltpu.PrefetchScalarGridSpec(
            num_scalar_prefetch=0,
            grid=grid,
            in_specs=[
                pl.BlockSpec((tm, tk), lambda i, j, k: (i, k)),   # x
                pl.BlockSpec((tn, tk), lambda i, j, k: (j, k)),   # w (torch layout)
                pl.BlockSpec((1, tn), lambda i, j, k: (0, j)),    # bias
            ],
            out_specs=pl.BlockSpec((tm, tn), lambda i, j, k: (i, j)),
            scratch_shapes=[pltpu.VMEM((tm, tn), jnp.float32)]),
        compiler_params=pltpu.CompilerParams(
            dimension_semantics=("parallel", "parallel", "arbitrary"),
            vmem_limit_bytes=vmem_limit),
        cost_estimate=cost,
    )(x2d, w, b.reshape(1, O))
    return out[:M0] if Mp != M0 else out


def _pallas_attention_proj(qkv3d, rel_bias, mask_i32, proj_w, proj_b, scale, num_heads):
    """qkv3d:(B,N,3C), rel_bias:(H,N,N) f32 or None, mask:(B,1,N) i32 -> (B,N,C)."""
    vmem_limit = _hw_config()[0]
    B, N, three_c = qkv3d.shape
    C = three_c // 3
    H = num_heads
    D = C // H
    Gh = _head_group_size(H, D)          # heads per lane-aligned group
    NG = H // Gh                         # head-group grid extent
    GW = Gh * D
    has_bias = rel_bias is not None
    mxu_dtype = _mxu_dtype(qkv3d.dtype)

    in_specs = [
        pl.BlockSpec((None, N, three_c), lambda b, g: (b, 0, 0)),  # qkv slab (reused over g)
        pl.BlockSpec((None, 1, N), lambda b, g: (b, 0, 0)),        # key mask
    ]
    args = [qkv3d, mask_i32]
    if has_bias:
        in_specs.append(pl.BlockSpec((Gh, N, N), lambda b, g: (g, 0, 0)))  # per-group bias
        args.append(rel_bias)
    in_specs += [
        pl.BlockSpec((C, GW), lambda b, g: (0, g)),                # proj_w column block
        pl.BlockSpec((1, C), lambda b, g: (0, 0)),                 # proj bias
    ]
    args += [proj_w, proj_b.reshape(1, C)]

    itemsize = qkv3d.dtype.itemsize
    cost = pl.CostEstimate(
        flops=4 * B * H * N * N * D + 2 * B * N * C * C,
        transcendentals=B * H * N * N,
        bytes_accessed=(itemsize * (B * N * three_c + B * N * C + C * C + C)
                        + (4 * H * N * N if has_bias else 0) + 4 * B * N))

    # TODO(synk): flash-style KV tiling inside the kernel for N >> 512 so the
    # per-head (N, N) f32 score slab stays bounded on 64 MiB v7x VMEM.
    return pl.pallas_call(
        partial(_attn_proj_kernel, scale=scale, heads_per_group=Gh, head_dim=D,
                num_groups=NG, mxu_dtype=mxu_dtype, has_bias=has_bias),
        out_shape=jax.ShapeDtypeStruct((B, N, C), qkv3d.dtype),
        grid_spec=pltpu.PrefetchScalarGridSpec(
            num_scalar_prefetch=0,
            grid=(B, NG),
            in_specs=in_specs,
            out_specs=pl.BlockSpec((None, N, C), lambda b, g: (b, 0, 0)),  # resident over g
            scratch_shapes=[pltpu.VMEM((N, C), jnp.float32)]),
        compiler_params=pltpu.CompilerParams(
            dimension_semantics=("parallel", "arbitrary"),
            vmem_limit_bytes=vmem_limit),
        cost_estimate=cost,
    )(*args)


def attention_forward(x, params, mask=None, relative_position_bias=None,
                      num_heads=8, qk_scale=None):
    """Pallas implementation of Attention.forward."""
    B, N, C = x.shape
    H = num_heads
    D = C // H
    scale = float(qk_scale) if qk_scale is not None else float(D) ** (-0.5)

    # --- qkv projection (F.linear with optional [q_bias, 0, v_bias] bias) ---
    if params.get("q_bias", None) is not None:
        qkv_b = jnp.concatenate(
            [params["q_bias"], jnp.zeros_like(params["v_bias"]), params["v_bias"]]
        ).astype(x.dtype)
    else:
        qkv_b = jnp.zeros((3 * C,), x.dtype)
    qkv = _pallas_linear(x.reshape(B * N, C), params["qkv_w"], qkv_b)   # (B*N, 3C)
    qkv = qkv.reshape(B, N, 3 * C)          # contiguous reshape: no HBM transpose

    rel_bias = (None if relative_position_bias is None
                else relative_position_bias.astype(jnp.float32))        # bias path skipped if None
    mask_i32 = (jnp.ones((B, 1, N), jnp.int32) if mask is None
                else mask.astype(jnp.int32).reshape(B, 1, N))

    # --- fused attention core + output projection (no HBM context round-trip) ---
    # TODO(synk): attn_drop / proj_drop omitted (p = 0.0 default -> identity).
    return _pallas_attention_proj(qkv, rel_bias, mask_i32,
                                  params["proj_w"], params["proj_b"], scale, H)


# ------------------------------ reference ---------------------------------- #

def attention_reference(x, params, mask, relative_position_bias, num_heads, qk_scale=None):
    B, N, C = x.shape
    H = num_heads
    D = C // H
    scale = qk_scale if qk_scale is not None else D ** (-0.5)
    if params.get("q_bias", None) is not None:
        qkv_b = jnp.concatenate(
            [params["q_bias"], jnp.zeros_like(params["v_bias"]), params["v_bias"]])
    else:
        qkv_b = None
    qkv = x @ params["qkv_w"].T
    if qkv_b is not None:
        qkv = qkv + qkv_b
    qkv = qkv.reshape(B, N, 3, H, D).transpose(2, 0, 3, 1, 4)
    q, k, v = qkv[0], qkv[1], qkv[2]
    q = q * scale
    attn = jnp.einsum("bhnd,bhmd->bhnm", q.astype(jnp.float32), k.astype(jnp.float32))
    if relative_position_bias is not None:
        attn = attn + relative_position_bias[None]
    if mask is not None:
        attn = jnp.where(mask[:, None, None, :].astype(bool), attn, -jnp.inf)
    attn = jax.nn.softmax(attn, axis=-1).astype(x.dtype)
    out = jnp.einsum("bhnm,bhmd->bhnd", attn, v).transpose(0, 2, 1, 3).reshape(B, N, C)
    return out @ params["proj_w"].T + params["proj_b"]


# --------------------------------- main ------------------------------------ #

if __name__ == "__main__":
    B, N, C, H = 2, 8, 32, 8   # head_dim = 4
    key = jax.random.PRNGKey(0)
    kx, kw1, kw2, kb2, kqb, kvb, kbias = jax.random.split(key, 7)

    x = jax.random.normal(kx, (B, N, C), jnp.float32)

    params = {
        "qkv_w": 0.02 * jax.random.normal(kw1, (3 * C, C), jnp.float32),
        "proj_w": 0.02 * jax.random.normal(kw2, (C, C), jnp.float32),
        "proj_b": 0.02 * jax.random.normal(kb2, (C,), jnp.float32),
        # qkv_bias=True branch: q_bias / v_bias parameters (k bias implicitly zero)
        "q_bias": 0.02 * jax.random.normal(kqb, (C,), jnp.float32),
        "v_bias": 0.02 * jax.random.normal(kvb, (C,), jnp.float32),
    }

    # optional inputs: per-token key mask and per-head relative position bias
    valid_lens = jnp.array([N, N - 2])
    mask = (jnp.arange(N)[None, :] < valid_lens[:, None]).astype(jnp.int32)   # (B, N)
    rel_bias = 0.1 * jax.random.normal(kbias, (H, N, N), jnp.float32)

    # Tolerances cover bf16 MXU operands (f32 accumulation) and the EUP approximate
    # reciprocal in the softmax; expected error is <~1e-3 at these magnitudes,
    # while real bugs (wrong head slicing / mask / bias) show up at >>1e-2.
    out = attention_forward(x, params, mask=mask, relative_position_bias=rel_bias,
                            num_heads=H)
    out = jax.block_until_ready(out)
    ref = attention_reference(x, params, mask, rel_bias, num_heads=H)
    np.testing.assert_allclose(np.asarray(out), np.asarray(ref), atol=1e-2, rtol=1e-2)

    # no-bias / no-mask path (bias DMA + adds skipped entirely in the kernel)
    out2 = attention_forward(x, params, mask=None, relative_position_bias=None,
                             num_heads=H)
    out2 = jax.block_until_ready(out2)
    ref2 = attention_reference(x, params, None, None, num_heads=H)
    np.testing.assert_allclose(np.asarray(out2), np.asarray(ref2), atol=1e-2, rtol=1e-2)

    print("KERNEL_OK")
</pallas_src>

<mosaic_0001>
module attributes {stable_mosaic.version = 11 : i64} {
  func.func @_linear_kernel(%arg0: i32, %arg1: i32, %arg2: i32, %arg3: memref<16x32xf32, #tpu.memory_space<vmem>>, %arg4: memref<96x32xf32, #tpu.memory_space<vmem>>, %arg5: memref<1x96xf32, #tpu.memory_space<vmem>>, %arg6: memref<16x96xf32, #tpu.memory_space<vmem>>, %arg7: memref<16x96xf32, #tpu.memory_space<vmem>>) attributes {dimension_semantics = [#tpu.dimension_semantics<parallel>, #tpu.dimension_semantics<parallel>, #tpu.dimension_semantics<arbitrary>], iteration_bounds = array<i64: 1, 1, 1>, scalar_prefetch = 0 : i64, scratch_operands = 1 : i64, tpu.core_type = #tpu.core_type<tc>, window_params = [{transform_indices = @transform_0, window_bounds = array<i64: 16, 32>}, {transform_indices = @transform_1, window_bounds = array<i64: 96, 32>}, {transform_indices = @transform_2, window_bounds = array<i64: 1, 96>}, {transform_indices = @transform_3, window_bounds = array<i64: 16, 96>}]} {
    %c0_i32 = arith.constant 0 : i32
    %0 = arith.cmpi eq, %arg2, %c0_i32 : i32
    %1 = arith.extui %0 : i1 to i32
    %c0_i32_0 = arith.constant 0 : i32
    %2 = arith.cmpi ne, %1, %c0_i32_0 : i32
    scf.if %2 {
      %cst_10 = arith.constant 0.000000e+00 : f32
      %14 = vector.broadcast %cst_10 : f32 to vector<16x96xf32>
      %c0_11 = arith.constant 0 : index
      %c0_12 = arith.constant 0 : index
      %15 = vector.load %arg7[%c0_11, %c0_12] : memref<16x96xf32, #tpu.memory_space<vmem>>, vector<16x96xf32>
      tpu.vector_store %arg7[%c0_11, %c0_12], %14 {strides = array<i32>} : memref<16x96xf32, #tpu.memory_space<vmem>>, vector<16x96xf32>,
    } else {
    }
    %c0 = arith.constant 0 : index
    %c0_1 = arith.constant 0 : index
    %3 = vector.load %arg7[%c0, %c0_1] : memref<16x96xf32, #tpu.memory_space<vmem>>, vector<16x96xf32>
    %c0_2 = arith.constant 0 : index
    %c0_3 = arith.constant 0 : index
    %4 = vector.load %arg3[%c0_2, %c0_3] : memref<16x32xf32, #tpu.memory_space<vmem>>, vector<16x32xf32>
    %5 = arith.truncf %4 : vector<16x32xf32> to vector<16x32xbf16>
    %c0_4 = arith.constant 0 : index
    %c0_5 = arith.constant 0 : index
    %6 = vector.load %arg4[%c0_4, %c0_5] : memref<96x32xf32, #tpu.memory_space<vmem>>, vector<96x32xf32>
    %7 = arith.truncf %6 : vector<96x32xf32> to vector<96x32xbf16>
    %cst = arith.constant dense<0.000000e+00> : vector<16x96xf32>
    %8 = tpu.matmul %5, %7, %cst {dimension_numbers = #tpu.dot_dimension_numbers<[1], [1], [0], [0], [0, 0, 1, 0], [], []>} : vector<16x32xbf16>, vector<96x32xbf16>, vector<16x96xf32> -> vector<16x96xf32>
    %9 = arith.addf %3, %8 : vector<16x96xf32>
    %c0_6 = arith.constant 0 : index
    %c0_7 = arith.constant 0 : index
    %10 = vector.load %arg7[%c0_6, %c0_7] : memref<16x96xf32, #tpu.memory_space<vmem>>, vector<16x96xf32>
    tpu.vector_store %arg7[%c0_6, %c0_7], %9 {strides = array<i32>} : memref<16x96xf32, #tpu.memory_space<vmem>>, vector<16x96xf32>,
    %c0_i32_8 = arith.constant 0 : i32
    %11 = arith.cmpi eq, %arg2, %c0_i32_8 : i32
    %12 = arith.extui %11 : i1 to i32
    %c0_i32_9 = arith.constant 0 : i32
    %13 = arith.cmpi ne, %12, %c0_i32_9 : i32
    scf.if %13 {
      %c0_10 = arith.constant 0 : index
      %c0_11 = arith.constant 0 : index
      %14 = vector.load %arg7[%c0_10, %c0_11] : memref<16x96xf32, #tpu.memory_space<vmem>>, vector<16x96xf32>
      %c0_12 = arith.constant 0 : index
      %c0_13 = arith.constant 0 : index
      %15 = vector.load %arg5[%c0_12, %c0_13] : memref<1x96xf32, #tpu.memory_space<vmem>>, vector<1x96xf32>
      %16 = vector.broadcast %15 : vector<1x96xf32> to vector<16x96xf32>
      %17 = arith.addf %14, %16 : vector<16x96xf32>
      %c0_14 = arith.constant 0 : index
      %c0_15 = arith.constant 0 : index
      %18 = vector.load %arg6[%c0_14, %c0_15] : memref<16x96xf32, #tpu.memory_space<vmem>>, vector<16x96xf32>
      tpu.vector_store %arg6[%c0_14, %c0_15], %17 {strides = array<i32>} : memref<16x96xf32, #tpu.memory_space<vmem>>, vector<16x96xf32>,
    } else {
    }
    return
  }
  func.func @transform_0(%arg0: i32, %arg1: i32, %arg2: i32) -> (i32, i32) {
    %c0_i32 = arith.constant 0 : i32
    return %arg0, %arg2 : i32, i32
  }
  func.func @transform_1(%arg0: i32, %arg1: i32, %arg2: i32) -> (i32, i32) {
    %c0_i32 = arith.constant 0 : i32
    return %arg1, %arg2 : i32, i32
  }
  func.func @transform_2(%arg0: i32, %arg1: i32, %arg2: i32) -> (i32, i32) {
    %c0_i32 = arith.constant 0 : i32
    %c0_i32_0 = arith.constant 0 : i32
    return %c0_i32, %arg1 : i32, i32
  }
  func.func @transform_3(%arg0: i32, %arg1: i32, %arg2: i32) -> (i32, i32) {
    %c0_i32 = arith.constant 0 : i32
    return %arg0, %arg1 : i32, i32
  }
}

</mosaic_0001>

<llo_original>
// kernel: tpu_custom_call.1
$region0: #{tpu_custom_call.1}
  #allocation0 [shape = 'u32[]', space=smem, size = 0x4, offset = 0x4, fixed_abs, tag = 'smem constant byte address 0x4 - core index']
  #allocation1 [shape = 'u32[144,128]{1,0:T(1,128)}', space=vmem, size = 0x12000, scoped, tag = 'internal scratch']
  #allocation2 [shape = 'f32[16,96]{1,0:T(8,128)}', space=vmem, size = 0x2000, scoped, tag = 'scratch operand']
  %s0 = inlined_call_operand.vmem [shape: f32[16,32], index: 0, kind: input, shape index: {}]
  %s1 = inlined_call_operand.vmem [shape: f32[96,32], index: 1, kind: input, shape index: {}]
  %s2 = inlined_call_operand.vmem [shape: f32[1,96], index: 2, kind: input, shape index: {}]
  %s3 = inlined_call_operand.hbm [shape: f32[16,96], index: 3, kind: output, shape index: {}]
  %s4 = sld [smem:[#allocation0]]
  $region30: #{tpu_custom_call.1} parent=0
    _
  %s6 = ssub.s32 1, %s4
  %s7 = scalar_select 0, %s6, %s4
  $region1: #{tpu_custom_call.1} parent=0
    #allocation3 [shape = 'u8[8192]{0}', space=vmem, size = 0x2000, scoped, tag = 'output window, operand 0, single buffered']
    #allocation4 [shape = 's32[1]{0}', space=sflag, size = 0x4, scoped, tag = 'scoped memory for tpu_custom_call.1']
    %8 = vsyncpa [#allocation4], 0
    // Predicated region
    $region2: #{tpu_custom_call.1} parent=1 // pred_check
      _
    $region3: #{tpu_custom_call.1} parent=1 // pred_check_branch
      %10 = sbr.rel (0) target = $region5
    $region4: #{tpu_custom_call.1} parent=1 // pred_region
      _
    $region5: #{tpu_custom_call.1} parent=1 // pred_fallthru
      _
    // Predicated region
    $region6: #{tpu_custom_call.1} parent=1 // pred_check
      _
    $region7: #{tpu_custom_call.1} parent=1 // pred_check_branch
      %12 = sbr.rel (0) target = $region9
    $region8: #{tpu_custom_call.1} parent=1 // pred_region
      _
    $region9: #{tpu_custom_call.1} parent=1 // pred_fallthru
      _
    // Predicated region
    $region10: #{tpu_custom_call.1} parent=1 // pred_check
      _
    $region11: #{tpu_custom_call.1} parent=1 // pred_check_branch
      %14 = sbr.rel (0) target = $region13
    $region12: #{tpu_custom_call.1} parent=1 // pred_region
      _
    $region13: #{tpu_custom_call.1} parent=1 // pred_fallthru
      _
    %p16 = scmp.eq.s32.totalorder 0, 0
    // Predicated region
    $region14: #{tpu_custom_call.1} parent=1 // pred_check
      %p17 = pneg %p16
    $region15: #{tpu_custom_call.1} parent=1 // pred_check_branch
      %19 = sbr.rel (%p17) target = $region17
    $region16: #{tpu_custom_call.1} parent=1 // pred_region
      %vm20 = vcmask 785408
      %21 = vst.msk [vmem:[#allocation2] sm:$0xff] %vm20, 0.0
      %22 = vst.msk [vmem:[#allocation2 + $0x8] sm:$0xff] %vm20, 0.0
    $region17: #{tpu_custom_call.1} parent=1 // pred_fallthru
      _
    %v23 = vld [vmem:[#allocation2] sm:$0xff]
    %v24 = vld [vmem:[#allocation2 + $0x8] sm:$0xff]
    %v25 = vld [vmem:[%s0] sm:$0xff]
    %v26 = vld [vmem:[%s0 + $0x8] sm:$0xff]
    %v27 = vpack.c.bf16 %v26, %v25
    %v28 = vld [vmem:[%s1] sm:$0xff]
    %v29 = vld [vmem:[%s1 + $0x8] sm:$0xff]
    %v30 = vld [vmem:[%s1 + $0x10] sm:$0xff]
    %v31 = vld [vmem:[%s1 + $0x18] sm:$0xff]
    %v32 = vld [vmem:[%s1 + $0x20] sm:$0xff]
    %v33 = vld [vmem:[%s1 + $0x28] sm:$0xff]
    %v34 = vld [vmem:[%s1 + $0x30] sm:$0xff]
    %v35 = vld [vmem:[%s1 + $0x38] sm:$0xff]
    %v36 = vld [vmem:[%s1 + $0x40] sm:$0xff]
    %v37 = vld [vmem:[%s1 + $0x48] sm:$0xff]
    %v38 = vld [vmem:[%s1 + $0x50] sm:$0xff]
    %v39 = vld [vmem:[%s1 + $0x58] sm:$0xff]
    %v40 = vpack.c.bf16 %v29, %v28
    %v41 = vpack.c.bf16 %v31, %v30
    %v42 = vpack.c.bf16 %v33, %v32
    %v43 = vpack.c.bf16 %v35, %v34
    %v44 = vpack.c.bf16 %v37, %v36
    %v45 = vpack.c.bf16 %v39, %v38
    %vm46 = vcmask 261120
    %v48 = vsel %vm46, %v27, 0
    %v51 = vsel %vm46, %v40, 0
    %v54 = vsel %vm46, %v41, 0
    %v57 = vsel %vm46, %v42, 0
    %v60 = vsel %vm46, %v43, 0
    %v63 = vsel %vm46, %v44, 0
    %v66 = vsel %vm46, %v45, 0
    %68 = vmatprep.subr.bf16.mxu0 0
    %69 = vmatpush1.bf16.xpose.msra.mxu0 0
    %70 = vmatprep.subr.bf16.mxu0 0
    %71 = vmatpush1.bf16.xpose.msra.mxu0 0
    %72 = vmatprep.subr.bf16.mxu0 0
    %73 = vmatpush1.bf16.xpose.msra.mxu0 %v66
    %74 = vmatprep.subr.bf16.mxu0 0
    %75 = vmatpush1.bf16.xpose.msra.mxu0 %v63
    %76 = vmatprep.subr.bf16.mxu0 0
    %77 = vmatpush1.bf16.xpose.msra.mxu0 %v60
    %78 = vmatprep.subr.bf16.mxu0 0
    %79 = vmatpush1.bf16.xpose.msra.mxu0 %v57
    %80 = vmatprep.subr.bf16.mxu0 0
    %81 = vmatpush1.bf16.xpose.msra.mxu0 %v54
    %82 = vmatprep.subr.bf16.mxu0 0
    %83 = vmatpush1.bf16.xpose.msra.mxu0 %v51
    %84 = vmatprep.subr.bf16.mxu0 0
    %85 = vmatpush2.bf16.xpose.msra.mxu0 0
    %86 = vmatprep.subr.bf16.mxu0 0
    %87 = vmatpush2.bf16.xpose.msra.mxu0 0
    %88 = vmatprep.subr.bf16.mxu0 0
    %89 = vmatpush2.bf16.xpose.msra.mxu0 0
    %90 = vmatprep.subr.bf16.mxu0 0
    %91 = vmatpush2.bf16.xpose.msra.mxu0 0
    %92 = vmatprep.subr.bf16.mxu0 0
    %93 = vmatpush2.bf16.xpose.msra.mxu0 0
    %94 = vmatprep.subr.bf16.mxu0 0
    %95 = vmatpush2.bf16.xpose.msra.mxu0 0
    %96 = vmatprep.subr.bf16.mxu0 0
    %97 = vmatpush2.bf16.xpose.msra.mxu0 0
    %98 = vmatprep.subr.bf16.mxu0 0
    %99 = vmatpush2.bf16.xpose.msra.mxu0 0
    %100 = vmatprep.mubr.bf16.mxu0 0
    %101 = vmatmul.mubr.bf16.gmra.mxu0 %v48
    %v102 = vpop.f32.mrf.mxu0
    %v103 = vadd.f32 0.0, %v102
    %v104 = vpop.f32.mrf.mxu0
    %v105 = vpop.f32.mrf.mxu0
    %v106 = vadd.f32 0.0, %v105
    %v107 = vpop.f32.mrf.mxu0
    %108 = vdwg.mxu0
    %v109 = vadd.f32 %v23, %v103
    %v110 = vadd.f32 %v24, %v106
    %vm111 = vcmask 785408
    %112 = vst.msk [vmem:[#allocation2] sm:$0xff] %vm111, %v109
    %113 = vst.msk [vmem:[#allocation2 + $0x8] sm:$0xff] %vm111, %v110
    // Predicated region
    $region18: #{tpu_custom_call.1} parent=1 // pred_check
      %p114 = pneg %p16
    $region19: #{tpu_custom_call.1} parent=1 // pred_check_branch
      %116 = sbr.rel (%p114) target = $region21
    $region20: #{tpu_custom_call.1} parent=1 // pred_region
      %v117 = vld [vmem:[#allocation2] sm:$0xff]
      %v118 = vld [vmem:[#allocation2 + $0x8] sm:$0xff]
      %v119 = vld [vmem:[%s2] sm:$0x1]
      %v121 = vlaneseq
      %v122 = vshrl.u32 %v121, 7
      %v123 = vsub.s32 0, %v122
      %v124 = vrot.slane %v119, %v123
      %v126 = vadd.f32 %v117, %v124
      %v127 = vadd.f32 %v118, %v124
      %128 = vst.msk [vmem:[#allocation3] sm:$0xff] %vm111, %v126
      %129 = vst.msk [vmem:[#allocation3 + $0x8] sm:$0xff] %vm111, %v127
    $region21: #{tpu_custom_call.1} parent=1 // pred_fallthru
      _
    // Predicated region
    $region22: #{tpu_custom_call.1} parent=1 // pred_check
      _
    $region23: #{tpu_custom_call.1} parent=1 // pred_check_branch
      %131 = sbr.rel (0) target = $region25
    $region24: #{tpu_custom_call.1} parent=1 // pred_region
      %s133 = ssub.s32 256, 256
      %134 = vsyncadd [#allocation4], %s133
      %s135 = sshll.u32 [#allocation3], 4
      %s136 = int_to_ptr.vmem [resolvable:$true] %s135
      %141 = dma.vmem_to_hbm [thread:$0]  %s136, 256, %s3, [#allocation4], 128, 128, 8
    $region25: #{tpu_custom_call.1} parent=1 // pred_fallthru
      _
    // Predicated region
    $region26: #{tpu_custom_call.1} parent=1 // pred_check
      _
    $region27: #{tpu_custom_call.1} parent=1 // pred_check_branch
      %143 = sbr.rel (0) target = $region29
    $region28: #{tpu_custom_call.1} parent=1 // pred_region
      %144 = dma.done [#allocation4], 256
    $region29: #{tpu_custom_call.1} parent=1 // pred_fallthru
      _
    %145 = vsyncpa [#allocation4], 1

</llo_original>
